<compile_context>
chip_gen: v5e
topology: v5e:2x2
jax: 0.10.0
libtpu: 0.0.40
codegen_flags: <defaults>
</compile_context>

<pallas_src>
import jax
import jax.numpy as jnp
from jax.experimental import pallas as pl
from jax.experimental.pallas import tpu as pltpu

_LANES = 128


def _cdiv(a: int, b: int) -> int:
    return -(-a // b)


def _round_up(x: int, m: int) -> int:
    return ((x + m - 1) // m) * m


def _choose_tile_rows(rows: int, max_tile_rows: int) -> int:
    if rows <= 32:
        # Single full-extent block (always a legal block shape).
        return rows
    # Aim for >= 2 blocks so the "parallel" grid axis can shard across
    # TensorCores (v7x megacore); multiple of 32 keeps int8/bf16 sublane
    # packing aligned.
    tile = min(_round_up(max_tile_rows, 32), _round_up(_cdiv(rows, 2), 32))
    return max(tile, 32)


def _make_accuracy_kernel(threshold: float):
    thr = float(threshold)  # Python literal -> no captured jnp constant.

    def accuracy_kernel(nrows_ref, yt_ref, yp_ref, count_ref):
        tile_rows = yt_ref.shape[0]
        # Threshold + truncating int compare (matches torch .int()) in the
        # input's native dtype; all VPU work, fully hidden under the DMA.
        yp_int = (yp_ref[...] > thr).astype(jnp.int32)
        yt_int = yt_ref[...].astype(jnp.int32)
        eq = yp_int == yt_int
        # Mask rows beyond the valid extent (handles the partial last block
        # without any wrapper-side padding/copies).
        row = (jax.lax.broadcasted_iota(jnp.int32, (tile_rows, _LANES), 0)
               + pl.program_id(0) * tile_rows)
        matches = jnp.logical_and(eq, row < nrows_ref[0]).astype(jnp.int32)
        # Sublane-axis reduce only; the cross-lane reduce happens in the
        # wrapper over the tiny (num_blocks, 1, 128) partials tensor.
        partial = jnp.sum(matches, axis=0, keepdims=True)        # (1, 128)
        count_ref[...] = partial.reshape(1, 1, _LANES)            # (1, 1, 128)

    return accuracy_kernel


def accuracy(y_true: jax.Array, y_pred: jax.Array, threshold: float = 0.5,
             max_tile_rows: int = 8192) -> jax.Array:
    """Pallas-TPU implementation of the Accuracy module's forward pass."""
    assert y_true.shape == y_pred.shape
    thr = float(threshold)
    total = 1
    for d in y_true.shape:
        total *= d
    assert 0 < total < 2 ** 31  # int32 match counting is exact in this range

    rows = total // _LANES
    rem = total - rows * _LANES

    yt_flat = y_true.reshape(-1)
    yp_flat = y_pred.reshape(-1)

    n_match = jnp.int32(0)

    if rows > 0:
        bulk = rows * _LANES
        if rem:
            # Prefix slice only in the lane-unaligned case (rare in practice).
            yt2 = jax.lax.slice(yt_flat, (0,), (bulk,)).reshape(rows, _LANES)
            yp2 = jax.lax.slice(yp_flat, (0,), (bulk,)).reshape(rows, _LANES)
        else:
            # Free bitcast reshape; no HBM copy.
            yt2 = yt_flat.reshape(rows, _LANES)
            yp2 = yp_flat.reshape(rows, _LANES)

        tile_rows = _choose_tile_rows(rows, max_tile_rows)
        num_blocks = _cdiv(rows, tile_rows)

        in_bytes_per_row = _LANES * (yt2.dtype.itemsize + yp2.dtype.itemsize)
        block_in_bytes = tile_rows * in_bytes_per_row
        # 2 inputs x 2 pipeline buffers + headroom; capped well under v7x's
        # 64 MiB physical VMEM (default tiles -> ~24 MiB for f32 inputs).
        vmem_limit = min(2 * block_in_bytes + (8 << 20), 48 << 20)

        cost = pl.CostEstimate(
            flops=2 * rows * _LANES,
            bytes_accessed=rows * in_bytes_per_row + num_blocks * _LANES * 4,
            transcendentals=0,
        )

        kernel = _make_accuracy_kernel(thr)
        nrows = jnp.array([rows], dtype=jnp.int32)   # scalar prefetch (SMEM)

        counts = pl.pallas_call(
            kernel,
            out_shape=jax.ShapeDtypeStruct((num_blocks, 1, _LANES), jnp.int32),
            grid_spec=pltpu.PrefetchScalarGridSpec(
                num_scalar_prefetch=1,
                grid=(num_blocks,),
                in_specs=[
                    pl.BlockSpec((tile_rows, _LANES), lambda i, n: (i, 0)),
                    pl.BlockSpec((tile_rows, _LANES), lambda i, n: (i, 0)),
                ],
                out_specs=pl.BlockSpec((1, 1, _LANES), lambda i, n: (i, 0, 0)),
            ),
            compiler_params=pltpu.CompilerParams(
                # Independent blocks -> parallel (megacore split on v7x).
                dimension_semantics=("parallel",),
                vmem_limit_bytes=vmem_limit,
            ),
            cost_estimate=cost,
        )(nrows, yt2, yp2)

        n_match = jnp.sum(counts)                     # exact int32 count

    if rem:
        # Tiny (<128 element) tail epilogue in plain jnp.
        tail_t = yt_flat[rows * _LANES:]
        tail_p = yp_flat[rows * _LANES:]
        tail_match = jnp.sum(
            ((tail_p > thr).astype(jnp.int32) == tail_t.astype(jnp.int32))
            .astype(jnp.int32))
        n_match = n_match + tail_match

    return n_match.astype(jnp.float32) / jnp.float32(total)


def accuracy_ref(y_true, y_pred, threshold=0.5):
    yp = (y_pred > threshold).astype(jnp.int32)
    yt = y_true.astype(jnp.int32)
    return (yp == yt).astype(jnp.float32).mean()


if __name__ == "__main__":
    key = jax.random.PRNGKey(0)
    k1, k2, k3, k4, k5, k6, k7, k8 = jax.random.split(key, 8)

    # 1) Small lane-aligned example (single block, no copies, no masking).
    shape = (2, 8, 128)  # 2048 elements -> 16 rows
    y_pred = jax.random.uniform(k1, shape, dtype=jnp.float32)
    y_true = (jax.random.uniform(k2, shape, dtype=jnp.float32) > 0.5).astype(jnp.float32)
    out = jax.block_until_ready(accuracy(y_true, y_pred, threshold=0.5))
    ref = accuracy_ref(y_true, y_pred, threshold=0.5)
    assert abs(float(out) - float(ref)) < 1e-6, (float(out), float(ref))

    # 2) Odd shape: total not a multiple of 128 -> prefix bulk + jnp tail.
    shape2 = (3, 50, 7)  # 1050 elements -> 8 rows + 26 tail
    y_pred2 = jax.random.uniform(k3, shape2, dtype=jnp.float32)
    y_true2 = (jax.random.uniform(k4, shape2, dtype=jnp.float32) > 0.5).astype(jnp.float32)
    out2 = jax.block_until_ready(accuracy(y_true2, y_pred2, threshold=0.5))
    ref2 = accuracy_ref(y_true2, y_pred2, threshold=0.5)
    assert abs(float(out2) - float(ref2)) < 1e-6, (float(out2), float(ref2))

    # 3) Multi-block path with a partial last block (in-kernel masking):
    #    80 rows -> tile 64 -> grid 2, second block has 16 valid rows.
    shape3 = (5, 16, 128)  # 10240 elements -> 80 rows
    y_pred3 = jax.random.uniform(k5, shape3, dtype=jnp.float32)
    y_true3 = (jax.random.uniform(k6, shape3, dtype=jnp.float32) > 0.5).astype(jnp.float32)
    out3 = jax.block_until_ready(accuracy(y_true3, y_pred3, threshold=0.5))
    ref3 = accuracy_ref(y_true3, y_pred3, threshold=0.5)
    assert abs(float(out3) - float(ref3)) < 1e-6, (float(out3), float(ref3))

    # 4) Narrow-dtype path (bf16 predictions, int8 labels): ~2.6x less HBM
    #    traffic; no upcast happens in the wrapper.
    shape4 = (4, 8, 128)  # 4096 elements -> 32 rows
    y_pred4 = jax.random.uniform(k7, shape4, dtype=jnp.float32).astype(jnp.bfloat16)
    y_true4 = (jax.random.uniform(k8, shape4, dtype=jnp.float32) > 0.5).astype(jnp.int8)
    out4 = jax.block_until_ready(accuracy(y_true4, y_pred4, threshold=0.5))
    ref4 = accuracy_ref(y_true4, y_pred4, threshold=0.5)
    assert abs(float(out4) - float(ref4)) < 1e-6, (float(out4), float(ref4))

    print("KERNEL_OK")
</pallas_src>

<mosaic_0001>
module attributes {stable_mosaic.version = 11 : i64} {
  func.func @accuracy_kernel(%arg0: i32, %arg1: memref<1xi32, #tpu.memory_space<smem>>, %arg2: memref<16x128xf32, #tpu.memory_space<vmem>>, %arg3: memref<16x128xf32, #tpu.memory_space<vmem>>, %arg4: memref<1x1x128xi32, #tpu.memory_space<vmem>>) attributes {dimension_semantics = [#tpu.dimension_semantics<parallel>], iteration_bounds = array<i64: 1>, scalar_prefetch = 1 : i64, scratch_operands = 0 : i64, tpu.core_type = #tpu.core_type<tc>, window_params = [{transform_indices = @transform_0, window_bounds = array<i64: 16, 128>}, {transform_indices = @transform_1, window_bounds = array<i64: 16, 128>}, {transform_indices = @transform_2, window_bounds = array<i64: 1, 1, 128>}]} {
    %c0 = arith.constant 0 : index
    %c0_0 = arith.constant 0 : index
    %0 = vector.load %arg3[%c0, %c0_0] : memref<16x128xf32, #tpu.memory_space<vmem>>, vector<16x128xf32>
    %cst = arith.constant 5.000000e-01 : f32
    %1 = vector.broadcast %cst : f32 to vector<16x128xf32>
    %2 = arith.cmpf ogt, %0, %1 : vector<16x128xf32>
    %3 = arith.extui %2 : vector<16x128xi1> to vector<16x128xi32>
    %c0_1 = arith.constant 0 : index
    %c0_2 = arith.constant 0 : index
    %4 = vector.load %arg2[%c0_1, %c0_2] : memref<16x128xf32, #tpu.memory_space<vmem>>, vector<16x128xf32>
    %5 = arith.fptosi %4 : vector<16x128xf32> to vector<16x128xi32>
    %6 = arith.cmpi eq, %3, %5 : vector<16x128xi32>
    %7 = tpu.iota {dimensions = array<i32: 0>} : vector<16x128xi32>
    %c16_i32 = arith.constant 16 : i32
    %8 = arith.muli %arg0, %c16_i32 : i32
    %9 = vector.broadcast %8 : i32 to vector<16x128xi32>
    %10 = arith.addi %7, %9 : vector<16x128xi32>
    %c0_3 = arith.constant 0 : index
    %11 = memref.load %arg1[%c0_3] : memref<1xi32, #tpu.memory_space<smem>>
    %12 = vector.broadcast %11 : i32 to vector<16x128xi32>
    %13 = arith.cmpi slt, %10, %12 : vector<16x128xi32>
    %14 = arith.andi %6, %13 : vector<16x128xi1>
    %15 = arith.extui %14 : vector<16x128xi1> to vector<16x128xi32>
    %cst_4 = arith.constant dense<0> : vector<128xi32>
    %16 = vector.multi_reduction <add>, %15, %cst_4 [0] : vector<16x128xi32> to vector<128xi32>
    %17 = vector.shape_cast %16 : vector<128xi32> to vector<1x128xi32>
    %18 = vector.shape_cast %17 : vector<1x128xi32> to vector<1x1x128xi32>
    %c0_5 = arith.constant 0 : index
    %c0_6 = arith.constant 0 : index
    %c0_7 = arith.constant 0 : index
    %19 = vector.load %arg4[%c0_5, %c0_6, %c0_7] : memref<1x1x128xi32, #tpu.memory_space<vmem>>, vector<1x1x128xi32>
    tpu.vector_store %arg4[%c0_5, %c0_6, %c0_7], %18 {strides = array<i32>} : memref<1x1x128xi32, #tpu.memory_space<vmem>>, vector<1x1x128xi32>,
    return
  }
  func.func @transform_0(%arg0: i32, %arg1: memref<1xi32, #tpu.memory_space<smem>>) -> (i32, i32) {
    %c0_i32 = arith.constant 0 : i32
    %c0_i32_0 = arith.constant 0 : i32
    return %arg0, %c0_i32 : i32, i32
  }
  func.func @transform_1(%arg0: i32, %arg1: memref<1xi32, #tpu.memory_space<smem>>) -> (i32, i32) {
    %c0_i32 = arith.constant 0 : i32
    %c0_i32_0 = arith.constant 0 : i32
    return %arg0, %c0_i32 : i32, i32
  }
  func.func @transform_2(%arg0: i32, %arg1: memref<1xi32, #tpu.memory_space<smem>>) -> (i32, i32, i32) {
    %c0_i32 = arith.constant 0 : i32
    %c0_i32_0 = arith.constant 0 : i32
    %c0_i32_1 = arith.constant 0 : i32
    return %arg0, %c0_i32, %c0_i32_0 : i32, i32, i32
  }
}

</mosaic_0001>

<llo_original>
// kernel: tpu_custom_call.1
$region0: #{tpu_custom_call.1}
  #allocation0 [shape = 'u32[]', space=smem, size = 0x4, offset = 0x4, fixed_abs, tag = 'smem constant byte address 0x4 - core index']
  #allocation1 [shape = 'u32[72,128]{1,0:T(1,128)}', space=vmem, size = 0x9000, scoped, tag = 'internal scratch']
  #allocation2 [shape = 's32[1]{0}', space=sflag, size = 0x4, scoped, tag = 'scoped memory for tpu_custom_call.1']
  #allocation3 [shape = 's32[1]{0:T(128)S(6)}', space=smem, size = 0x200, scoped, tag = 'prefetched SMEM operand 0']
  %s0 = inlined_call_operand.<no memory space> [shape: s32[1], index: 0, kind: input, shape index: {}]
  %s1 = inlined_call_operand.hbm [shape: f32[16,128], index: 1, kind: input, shape index: {}]
  %s2 = inlined_call_operand.hbm [shape: f32[16,128], index: 2, kind: input, shape index: {}]
  %s3 = inlined_call_operand.hbm [shape: s32[1,1,128], index: 3, kind: output, shape index: {}]
  %s4 = sld [smem:[#allocation0]]
  $region26: #{tpu_custom_call.1} parent=0
    _
  %s6 = ssub.s32 1, %s4
  %s7 = scalar_select 0, %s6, %s4
  %8 = sst [smem:[#allocation3]] %s0
  $region1: #{tpu_custom_call.1} parent=0
    #allocation4 [shape = 'u8[8192]{0}', space=vmem, size = 0x2000, scoped, tag = 'input window, operand 1, single buffered']
    #allocation5 [shape = 's32[1]{0}', space=sflag, size = 0x4, scoped, tag = 'scoped memory for tpu_custom_call.1']
    #allocation6 [shape = 's32[1]{0}', space=sflag, size = 0x4, scoped, tag = 'scoped memory for tpu_custom_call.1']
    #allocation7 [shape = 'u8[8192]{0}', space=vmem, size = 0x2000, scoped, tag = 'input window, operand 2, single buffered']
    #allocation8 [shape = 's32[1]{0}', space=sflag, size = 0x4, scoped, tag = 'scoped memory for tpu_custom_call.1']
    #allocation9 [shape = 'u8[512]{0}', space=vmem, size = 0x400, scoped, tag = 'output window, operand 0, single buffered']
    %9 = vsyncpa [#allocation5], 0
    %10 = vsyncpa [#allocation8], 0
    %11 = vsyncpa [#allocation6], 0
    // Predicated region
    $region2: #{tpu_custom_call.1} parent=1 // pred_check
      _
    $region3: #{tpu_custom_call.1} parent=1 // pred_check_branch
      %13 = sbr.rel (0) target = $region5
    $region4: #{tpu_custom_call.1} parent=1 // pred_region
      %15 = vsyncadd [#allocation5], 0
      %s16 = sshll.u32 %s1, 4
      %s17 = int_to_ptr.hbm [resolvable:$true] %s16
      %s18 = sshll.u32 [#allocation4], 4
      %s19 = int_to_ptr.vmem [resolvable:$true] %s18
      %24 = dma.hbm_to_vmem [thread:$0]  %s17, 256, %s19, [#allocation5], 128, 128, 8
    $region5: #{tpu_custom_call.1} parent=1 // pred_fallthru
      _
    // Predicated region
    $region6: #{tpu_custom_call.1} parent=1 // pred_check
      _
    $region7: #{tpu_custom_call.1} parent=1 // pred_check_branch
      %26 = sbr.rel (0) target = $region9
    $region8: #{tpu_custom_call.1} parent=1 // pred_region
      %28 = vsyncadd [#allocation8], 0
      %s29 = sshll.u32 %s2, 4
      %s30 = int_to_ptr.hbm [resolvable:$true] %s29
      %s31 = sshll.u32 [#allocation7], 4
      %s32 = int_to_ptr.vmem [resolvable:$true] %s31
      %37 = dma.hbm_to_vmem [thread:$0]  %s30, 256, %s32, [#allocation8], 128, 128, 8
    $region9: #{tpu_custom_call.1} parent=1 // pred_fallthru
      _
    // Predicated region
    $region10: #{tpu_custom_call.1} parent=1 // pred_check
      _
    $region11: #{tpu_custom_call.1} parent=1 // pred_check_branch
      %39 = sbr.rel (0) target = $region13
    $region12: #{tpu_custom_call.1} parent=1 // pred_region
      %41 = dma.done [#allocation5], 256
    $region13: #{tpu_custom_call.1} parent=1 // pred_fallthru
      _
    // Predicated region
    $region14: #{tpu_custom_call.1} parent=1 // pred_check
      _
    $region15: #{tpu_custom_call.1} parent=1 // pred_check_branch
      %43 = sbr.rel (0) target = $region17
    $region16: #{tpu_custom_call.1} parent=1 // pred_region
      %45 = dma.done [#allocation8], 256
    $region17: #{tpu_custom_call.1} parent=1 // pred_fallthru
      _
    %v46 = vld [vmem:[#allocation7] sm:$0xff]
    %v47 = vld [vmem:[#allocation7 + $0x8] sm:$0xff]
    %vm48 = vcmp.gt.f32.partialorder %v46, 0.5
    %vm49 = vcmp.gt.f32.partialorder %v47, 0.5
    %v50 = vsel %vm48, 1, 0
    %v51 = vsel %vm49, 1, 0
    %v52 = vld [vmem:[#allocation4] sm:$0xff]
    %v53 = vld [vmem:[#allocation4 + $0x8] sm:$0xff]
    %v54 = vcvt.f32.s32.to.zero.pseudo %v52
    %v55 = vcvt.f32.s32.to.zero.pseudo %v53
    %vm56 = vcmp.eq.s32.totalorder %v50, %v54
    %vm57 = vcmp.eq.s32.totalorder %v51, %v55
    %v58 = vlaneseq
    %v59 = vshrl.u32 %v58, 7
    %v60 = vadd.s32 %v59, 8
    %s61 = smul.u32 0, 16
    %v62 = vstv %s61
    %v63 = vadd.s32 %v59, %v62
    %v64 = vadd.s32 %v60, %v62
    %s65 = sld [smem:[#allocation3]]
    %v66 = vstv %s65
    %vm67 = vcmp.lt.s32.totalorder %v63, %v66
    %vm68 = vcmp.lt.s32.totalorder %v64, %v66
    %vm69 = vmand %vm56, %vm67
    %vm70 = vmand %vm57, %vm68
    %v71 = vsel %vm69, 1, 0
    %v72 = vsel %vm70, 1, 0
    %v73 = vadd.s32 %v71, %v72
    %v74 = vrot.slane %v73, 4
    %v75 = vadd.s32 %v73, %v74
    %v76 = vrot.slane %v75, 2
    %v77 = vadd.s32 %v75, %v76
    %v78 = vrot.slane %v77, 1
    %v79 = vadd.s32 %v77, %v78
    %80 = vst [vmem:[#allocation9] sm:$0x1] %v79
    // Predicated region
    $region18: #{tpu_custom_call.1} parent=1 // pred_check
      _
    $region19: #{tpu_custom_call.1} parent=1 // pred_check_branch
      %82 = sbr.rel (0) target = $region21
    $region20: #{tpu_custom_call.1} parent=1 // pred_region
      %84 = vsyncadd [#allocation6], 0
      %s86 = sshll.u32 [#allocation9], 4
      %s87 = int_to_ptr.vmem [resolvable:$true] %s86
      %s88 = sshll.u32 %s3, 4
      %s89 = int_to_ptr.hbm [resolvable:$true] %s88
      %91 = dma.vmem_to_hbm [thread:$0]  %s87, 16, %s89, [#allocation6]
    $region21: #{tpu_custom_call.1} parent=1 // pred_fallthru
      _
    // Predicated region
    $region22: #{tpu_custom_call.1} parent=1 // pred_check
      _
    $region23: #{tpu_custom_call.1} parent=1 // pred_check_branch
      %93 = sbr.rel (0) target = $region25
    $region24: #{tpu_custom_call.1} parent=1 // pred_region
      %95 = dma.done [#allocation6], 16
    $region25: #{tpu_custom_call.1} parent=1 // pred_fallthru
      _
    %96 = vsyncpa [#allocation5], 1
    %97 = vsyncpa [#allocation8], 1
    %98 = vsyncpa [#allocation6], 1

</llo_original>
